<compile_context>
chip_gen: v6e
topology: v6e:2x2x1
jax: 0.10.0
libtpu: 0.0.40
codegen_flags: <defaults>
</compile_context>

<pallas_src>
from functools import partial

import numpy as np
import jax
import jax.numpy as jnp
from jax.experimental import pallas as pl
from jax.experimental.pallas import tpu as pltpu

BLOCK_RATIO = 4  # same constant as the PyTorch module


def make_decimate_taps(q: int, num_zeros: int = 16) -> jnp.ndarray:
    """Deterministic stand-in for kazane.sinc_kernel * hann_window / q.

    N = 2 * num_zeros * q + 1 taps, built in float64 and cast to float32
    (as in Decimate.__init__).
    """
    N = 2 * num_zeros * q + 1
    t = np.arange(N, dtype=np.float64) - (N // 2)
    k = np.sinc(t / q)                                   # lowpass sinc, cutoff pi/q
    n = np.arange(N, dtype=np.float64)
    k *= 0.5 * (1.0 - np.cos(2.0 * np.pi * n / N))       # torch.hann_window (periodic)
    k /= q
    return jnp.asarray(k, dtype=jnp.float32)


def _round_up(a: int, b: int) -> int:
    return -(-a // b) * b


def _mxu_width() -> int:
    """MXU native width: 128 on TPU v2-v5, 256 on v6e/v7x (and default)."""
    try:
        kind = jax.devices()[0].device_kind.lower()
    except Exception:
        return 256
    return 128 if any(g in kind for g in ("v2", "v3", "v4", "v5")) else 256


def _split_bf16(a: jnp.ndarray):
    """f32 -> (hi, lo) bf16 split: a ~= hi + lo to ~16 mantissa bits."""
    hi = a.astype(jnp.bfloat16)
    lo = (a - hi.astype(jnp.float32)).astype(jnp.bfloat16)
    return hi, lo


def _build_tap_matrix(kernel: jnp.ndarray, q: int, TO: int, Kw: int) -> jnp.ndarray:
    """W[m, o] = k[m - o*q] if 0 <= m - o*q < N else 0   (shape [Kw, TO])."""
    N = kernel.shape[0]
    k = kernel.astype(jnp.float32)
    m = jnp.arange(Kw)[:, None]
    o = jnp.arange(TO)[None, :]
    idx = m - o * q
    return jnp.where((idx >= 0) & (idx < N), k[jnp.clip(idx, 0, N - 1)], 0.0)


def _decimate_kernel(xh_ref, xl_ref, wh_ref, wl_ref, o_ref):
    """One (TB, TO) output tile.

    Explicit BF16_BF16_F32_X3 (the review's "Precision.HIGH"): x ~= xh + xl,
    w ~= wh + wl, drop the lo*lo term.  All three dots are native bf16 MXU
    passes with f32 accumulation.
    """
    xh = xh_ref[...]
    wh = wh_ref[...]
    acc = jnp.dot(xh, wh, preferred_element_type=jnp.float32)
    acc = acc + jnp.dot(xl_ref[...], wh, preferred_element_type=jnp.float32)
    acc = acc + jnp.dot(xh, wl_ref[...], preferred_element_type=jnp.float32)
    o_ref[...] = acc.astype(o_ref.dtype)


@partial(jax.jit, static_argnames=("q",))
def decimate(x: jnp.ndarray, kernel: jnp.ndarray, q: int) -> jnp.ndarray:
    """Forward pass of kazane.Decimate: y[..., o] = sum_i k[i] * reflect_pad(x)[..., o*q + i]."""
    shape = x.shape
    T = int(shape[-1])
    N = int(kernel.shape[0])
    pad = N // 2
    if T <= pad:
        raise ValueError(f"reflect padding requires T > N//2 (got T={T}, N={N})")

    xf = x.reshape(-1, T).astype(jnp.float32)            # x.view(-1, 1, T) equivalent
    B = xf.shape[0]

    out_len = (T - 1) // q + 1                            # valid strided-conv outputs
    final_len = T // q if T >= N * q * BLOCK_RATIO else out_len
    P = T + 2 * pad                                       # reflect-padded length

    # ---- tile sizes (review items 1, 3, 7) ---------------------------------
    native = _mxu_width()                                 # 128 (<=v5) / 256 (v6e, v7x)
    TO = min(native, max(128, _round_up(out_len, 128)))   # output samples per frame

    def kw_of(to):                                        # frame width (multiple of 128)
        return _round_up((to - 1) * q + N, 128)

    budget = 20 << 20                                     # double-buffered working-set budget
    while TO > 128 and 8 * (native * kw_of(TO) + kw_of(TO) * TO + native * TO) > budget:
        TO -= 128                                         # only triggers for very large q
    Kw = kw_of(TO)
    TB_cap = native
    while TB_cap > 16 and 8 * (TB_cap * Kw + Kw * TO + TB_cap * TO) > budget:
        TB_cap //= 2

    Km = TO * q                                           # frame hop (multiple of 128)
    nT = -(-out_len // TO)                                # frames per batch row
    M = B * nT                                            # matmul M dimension (rows)
    TB = min(TB_cap, _round_up(M, 16))                    # rows per grid step (bf16 sublane-friendly)
    Mpad = _round_up(M, TB)
    Lx = _round_up(max(P, nT * Km + (Kw - Km)), 128)      # padded signal length

    # ---- reflect pad + im2row (one fused XLA producer; review items 3, 6) --
    x_pad = jnp.pad(xf, ((0, 0), (pad, pad)), mode="reflect")
    x_pad = jnp.pad(x_pad, ((0, 0), (0, Lx - P)))         # zeros feed only discarded outputs
    G = 128
    xb = x_pad.reshape(B, Lx // G, G)
    R, S = Km // G, Kw // G
    parts = [xb[:, j: j + (nT - 1) * R + 1: R, :] for j in range(S)]   # each [B, nT, G]
    frames = jnp.stack(parts, axis=2).reshape(M, Kw)      # frames[b*nT+t] = x_pad[b, t*Km:t*Km+Kw]
    frames = jnp.pad(frames, ((0, Mpad - M), (0, 0)))
    fh, fl = _split_bf16(frames)                          # hi/lo bf16 (same HBM bytes as f32)

    W = _build_tap_matrix(kernel, q, TO, Kw)
    wh, wl = _split_bf16(W)

    # ---- Pallas call --------------------------------------------------------
    vmem_est = 8 * (TB * Kw + Kw * TO + TB * TO)          # both buffers of every block, bytes
    grid_spec = pltpu.PrefetchScalarGridSpec(
        num_scalar_prefetch=0,
        grid=(Mpad // TB,),
        in_specs=[
            pl.BlockSpec((TB, Kw), lambda m: (m, 0)),     # frames hi
            pl.BlockSpec((TB, Kw), lambda m: (m, 0)),     # frames lo
            pl.BlockSpec((Kw, TO), lambda m: (0, 0)),     # taps hi (fetched once, VMEM-resident)
            pl.BlockSpec((Kw, TO), lambda m: (0, 0)),     # taps lo
        ],
        out_specs=pl.BlockSpec((TB, TO), lambda m: (m, 0)),   # lane-dense (TO % 128 == 0)
    )
    y = pl.pallas_call(
        _decimate_kernel,
        out_shape=jax.ShapeDtypeStruct((Mpad, TO), jnp.float32),
        grid_spec=grid_spec,
        compiler_params=pltpu.CompilerParams(
            dimension_semantics=("parallel",),            # grid steps shard across TensorCores
            vmem_limit_bytes=int(min(56 << 20, max(32 << 20, 2 * vmem_est))),
        ),
    )(fh, fl, wh, wl)

    # y[b*nT + t, j] is output sample t*TO + j of batch row b.
    y = y[:M].reshape(B, nT * TO)[:, :final_len]
    return y.reshape(shape[:-1] + (final_len,))


def decimate_ref(x, kernel, q):
    """Pure-NumPy float64 reference (direct framed conv) for correctness checking."""
    x = np.asarray(x, dtype=np.float64)
    k = np.asarray(kernel, dtype=np.float64)
    shape = x.shape
    T = shape[-1]
    N = k.shape[0]
    pad = N // 2
    xf = x.reshape(-1, T)
    xp = np.pad(xf, ((0, 0), (pad, pad)), mode="reflect")
    out_len = (xp.shape[-1] - N) // q + 1
    y = np.zeros((xf.shape[0], out_len), dtype=np.float64)
    for o in range(out_len):
        y[:, o] = xp[:, o * q:o * q + N] @ k
    if T >= N * q * BLOCK_RATIO:
        y = y[:, : T // q]
    return y.reshape(shape[:-1] + (y.shape[-1],))


if __name__ == "__main__":
    key = jax.random.PRNGKey(0)

    # --- test 1: short-signal branch (reflect pad, out_len = (T-1)//q + 1) ---
    q1 = 2
    kernel1 = make_decimate_taps(q1, num_zeros=16)        # shape (65,) float32
    k1, key = jax.random.split(key)
    x1 = jax.random.normal(k1, (2, 4, 64), dtype=jnp.float32)
    y1 = jax.block_until_ready(decimate(x1, kernel1, q=q1))
    assert y1.shape == (2, 4, 32), y1.shape
    np.testing.assert_allclose(
        np.asarray(y1), decimate_ref(np.asarray(x1), np.asarray(kernel1), q1),
        rtol=2e-5, atol=2e-5)                             # bf16x3 keeps ~1e-6 relative accuracy

    # --- test 2: long-signal branch (multi-frame im2row, trim to T//q) -------
    q2 = 4
    kernel2 = make_decimate_taps(q2, num_zeros=16)        # shape (129,) float32
    k2, key = jax.random.split(key)
    x2 = jax.random.normal(k2, (3, 5, 4098), dtype=jnp.float32)
    y2 = jax.block_until_ready(decimate(x2, kernel2, q=q2))
    assert y2.shape == (3, 5, 4098 // q2), y2.shape
    np.testing.assert_allclose(
        np.asarray(y2), decimate_ref(np.asarray(x2), np.asarray(kernel2), q2),
        rtol=2e-5, atol=2e-5)

    print("KERNEL_OK")
</pallas_src>

<mosaic_0001>
module attributes {stable_mosaic.version = 11 : i64} {
  func.func @_decimate_kernel(%arg0: i32, %arg1: memref<16x384xbf16, #tpu.memory_space<vmem>>, %arg2: memref<16x384xbf16, #tpu.memory_space<vmem>>, %arg3: memref<384x128xbf16, #tpu.memory_space<vmem>>, %arg4: memref<384x128xbf16, #tpu.memory_space<vmem>>, %arg5: memref<16x128xf32, #tpu.memory_space<vmem>>) attributes {dimension_semantics = [#tpu.dimension_semantics<parallel>], iteration_bounds = array<i64: 1>, scalar_prefetch = 0 : i64, scratch_operands = 0 : i64, tpu.core_type = #tpu.core_type<tc>, window_params = [{transform_indices = @transform_0, window_bounds = array<i64: 16, 384>}, {transform_indices = @transform_1, window_bounds = array<i64: 16, 384>}, {pipeline_mode = #tpu.pipeline_mode<synchronous>, transform_indices = @transform_2, window_bounds = array<i64: 384, 128>}, {pipeline_mode = #tpu.pipeline_mode<synchronous>, transform_indices = @transform_3, window_bounds = array<i64: 384, 128>}, {transform_indices = @transform_4, window_bounds = array<i64: 16, 128>}]} {
    %c0 = arith.constant 0 : index
    %c0_0 = arith.constant 0 : index
    %0 = vector.load %arg1[%c0, %c0_0] : memref<16x384xbf16, #tpu.memory_space<vmem>>, vector<16x384xbf16>
    %c0_1 = arith.constant 0 : index
    %c0_2 = arith.constant 0 : index
    %1 = vector.load %arg3[%c0_1, %c0_2] : memref<384x128xbf16, #tpu.memory_space<vmem>>, vector<384x128xbf16>
    %cst = arith.constant dense<0.000000e+00> : vector<16x128xf32>
    %2 = tpu.matmul %0, %1, %cst {dimension_numbers = #tpu.dot_dimension_numbers<[1], [0], [0], [1], [0, 0, 1, 1], [], []>} : vector<16x384xbf16>, vector<384x128xbf16>, vector<16x128xf32> -> vector<16x128xf32>
    %c0_3 = arith.constant 0 : index
    %c0_4 = arith.constant 0 : index
    %3 = vector.load %arg2[%c0_3, %c0_4] : memref<16x384xbf16, #tpu.memory_space<vmem>>, vector<16x384xbf16>
    %cst_5 = arith.constant dense<0.000000e+00> : vector<16x128xf32>
    %4 = tpu.matmul %3, %1, %cst_5 {dimension_numbers = #tpu.dot_dimension_numbers<[1], [0], [0], [1], [0, 0, 1, 1], [], []>} : vector<16x384xbf16>, vector<384x128xbf16>, vector<16x128xf32> -> vector<16x128xf32>
    %5 = arith.addf %2, %4 : vector<16x128xf32>
    %c0_6 = arith.constant 0 : index
    %c0_7 = arith.constant 0 : index
    %6 = vector.load %arg4[%c0_6, %c0_7] : memref<384x128xbf16, #tpu.memory_space<vmem>>, vector<384x128xbf16>
    %cst_8 = arith.constant dense<0.000000e+00> : vector<16x128xf32>
    %7 = tpu.matmul %0, %6, %cst_8 {dimension_numbers = #tpu.dot_dimension_numbers<[1], [0], [0], [1], [0, 0, 1, 1], [], []>} : vector<16x384xbf16>, vector<384x128xbf16>, vector<16x128xf32> -> vector<16x128xf32>
    %8 = arith.addf %5, %7 : vector<16x128xf32>
    %c0_9 = arith.constant 0 : index
    %c0_10 = arith.constant 0 : index
    %9 = vector.load %arg5[%c0_9, %c0_10] : memref<16x128xf32, #tpu.memory_space<vmem>>, vector<16x128xf32>
    tpu.vector_store %arg5[%c0_9, %c0_10], %8 {strides = array<i32>} : memref<16x128xf32, #tpu.memory_space<vmem>>, vector<16x128xf32>,
    return
  }
  func.func @transform_0(%arg0: i32) -> (i32, i32) {
    %c0_i32 = arith.constant 0 : i32
    %c0_i32_0 = arith.constant 0 : i32
    return %arg0, %c0_i32 : i32, i32
  }
  func.func @transform_1(%arg0: i32) -> (i32, i32) {
    %c0_i32 = arith.constant 0 : i32
    %c0_i32_0 = arith.constant 0 : i32
    return %arg0, %c0_i32 : i32, i32
  }
  func.func @transform_2(%arg0: i32) -> (i32, i32) {
    %c0_i32 = arith.constant 0 : i32
    %c0_i32_0 = arith.constant 0 : i32
    %c0_i32_1 = arith.constant 0 : i32
    return %c0_i32, %c0_i32_0 : i32, i32
  }
  func.func @transform_3(%arg0: i32) -> (i32, i32) {
    %c0_i32 = arith.constant 0 : i32
    %c0_i32_0 = arith.constant 0 : i32
    %c0_i32_1 = arith.constant 0 : i32
    return %c0_i32, %c0_i32_0 : i32, i32
  }
  func.func @transform_4(%arg0: i32) -> (i32, i32) {
    %c0_i32 = arith.constant 0 : i32
    %c0_i32_0 = arith.constant 0 : i32
    return %arg0, %c0_i32 : i32, i32
  }
}

</mosaic_0001>

<llo_original>
// kernel: decimate.1
$region0: #{decimate.1}
  #allocation0 [shape = 'u32[]', space=smem, size = 0x4, offset = 0x4, fixed_abs, tag = 'smem constant byte address 0x4 - core index']
  #allocation1 [shape = 'u32[144,128]{1,0:T(1,128)}', space=vmem, size = 0x12000, scoped, tag = 'internal scratch']
  %s0 = inlined_call_operand.vmem [shape: bf16[16,384], index: 0, kind: input, shape index: {}]
  %s1 = inlined_call_operand.vmem [shape: bf16[16,384], index: 1, kind: input, shape index: {}]
  %s2 = inlined_call_operand.vmem [shape: bf16[384,128], index: 2, kind: input, shape index: {}]
  %s3 = inlined_call_operand.vmem [shape: bf16[384,128], index: 3, kind: input, shape index: {}]
  %s4 = inlined_call_operand.vmem [shape: f32[16,128], index: 4, kind: output, shape index: {}]
  %s5 = sld [smem:[#allocation0]]
  $region26: #{decimate.1} parent=0
    _
  %s7 = ssub.s32 1, %s5
  %s8 = scalar_select 0, %s7, %s5
  // Predicated region
  $region2: #{decimate.1} parent=0 // pred_check
    _
  $region3: #{decimate.1} parent=0 // pred_check_branch
    %10 = sbr.rel (0) target = $region5
  $region4: #{decimate.1} parent=0 // pred_region
    _
  $region5: #{decimate.1} parent=0 // pred_fallthru
    _
  // Predicated region
  $region6: #{decimate.1} parent=0 // pred_check
    _
  $region7: #{decimate.1} parent=0 // pred_check_branch
    %12 = sbr.rel (0) target = $region9
  $region8: #{decimate.1} parent=0 // pred_region
    _
  $region9: #{decimate.1} parent=0 // pred_fallthru
    _
  // Predicated region
  $region10: #{decimate.1} parent=0 // pred_check
    _
  $region11: #{decimate.1} parent=0 // pred_check_branch
    %14 = sbr.rel (0) target = $region13
  $region12: #{decimate.1} parent=0 // pred_region
    _
  $region13: #{decimate.1} parent=0 // pred_fallthru
    _
  // Predicated region
  $region14: #{decimate.1} parent=0 // pred_check
    _
  $region15: #{decimate.1} parent=0 // pred_check_branch
    %16 = sbr.rel (0) target = $region17
  $region16: #{decimate.1} parent=0 // pred_region
    _
  $region17: #{decimate.1} parent=0 // pred_fallthru
    _
  %v18 = vld [vmem:[%s0] sm:$0xff]
  %v19 = vld [vmem:[%s0 + $0x8] sm:$0xf]
  %v20 = vld [vmem:[%s0 + $0xc] sm:$0xff]
  %v21 = vld [vmem:[%s0 + $0x14] sm:$0xf]
  %v22 = vld [vmem:[%s2] sm:$0xf]
  %v23 = vld [vmem:[%s2 + $0x4] sm:$0xf]
  %v24 = vld [vmem:[%s2 + $0x8] sm:$0xf]
  %v25 = vld [vmem:[%s2 + $0xc] sm:$0xf]
  %v26 = vld [vmem:[%s2 + $0x10] sm:$0xf]
  %v27 = vld [vmem:[%s2 + $0x14] sm:$0xf]
  %v28 = vld [vmem:[%s2 + $0x18] sm:$0xf]
  %v29 = vld [vmem:[%s2 + $0x1c] sm:$0xf]
  %v30 = vld [vmem:[%s2 + $0x20] sm:$0xf]
  %v31 = vld [vmem:[%s2 + $0x24] sm:$0xf]
  %v32 = vld [vmem:[%s2 + $0x28] sm:$0xf]
  %v33 = vld [vmem:[%s2 + $0x2c] sm:$0xf]
  %v34 = vld [vmem:[%s2 + $0x30] sm:$0xf]
  %v35 = vld [vmem:[%s2 + $0x34] sm:$0xf]
  %v36 = vld [vmem:[%s2 + $0x38] sm:$0xf]
  %v37 = vld [vmem:[%s2 + $0x3c] sm:$0xf]
  %v38 = vld [vmem:[%s2 + $0x40] sm:$0xf]
  %v39 = vld [vmem:[%s2 + $0x44] sm:$0xf]
  %v40 = vld [vmem:[%s2 + $0x48] sm:$0xf]
  %v41 = vld [vmem:[%s2 + $0x4c] sm:$0xf]
  %v42 = vld [vmem:[%s2 + $0x50] sm:$0xf]
  %v43 = vld [vmem:[%s2 + $0x54] sm:$0xf]
  %v44 = vld [vmem:[%s2 + $0x58] sm:$0xf]
  %v45 = vld [vmem:[%s2 + $0x5c] sm:$0xf]
  %v46 = vld [vmem:[%s2 + $0x60] sm:$0xf]
  %v47 = vld [vmem:[%s2 + $0x64] sm:$0xf]
  %v48 = vld [vmem:[%s2 + $0x68] sm:$0xf]
  %v49 = vld [vmem:[%s2 + $0x6c] sm:$0xf]
  %v50 = vld [vmem:[%s2 + $0x70] sm:$0xf]
  %v51 = vld [vmem:[%s2 + $0x74] sm:$0xf]
  %v52 = vld [vmem:[%s2 + $0x78] sm:$0xf]
  %v53 = vld [vmem:[%s2 + $0x7c] sm:$0xf]
  %v54 = vld [vmem:[%s2 + $0x80] sm:$0xf]
  %v55 = vld [vmem:[%s2 + $0x84] sm:$0xf]
  %v56 = vld [vmem:[%s2 + $0x88] sm:$0xf]
  %v57 = vld [vmem:[%s2 + $0x8c] sm:$0xf]
  %v58 = vld [vmem:[%s2 + $0x90] sm:$0xf]
  %v59 = vld [vmem:[%s2 + $0x94] sm:$0xf]
  %v60 = vld [vmem:[%s2 + $0x98] sm:$0xf]
  %v61 = vld [vmem:[%s2 + $0x9c] sm:$0xf]
  %v62 = vld [vmem:[%s2 + $0xa0] sm:$0xf]
  %v63 = vld [vmem:[%s2 + $0xa4] sm:$0xf]
  %v64 = vld [vmem:[%s2 + $0xa8] sm:$0xf]
  %v65 = vld [vmem:[%s2 + $0xac] sm:$0xf]
  %v66 = vld [vmem:[%s2 + $0xb0] sm:$0xf]
  %v67 = vld [vmem:[%s2 + $0xb4] sm:$0xf]
  %v68 = vld [vmem:[%s2 + $0xb8] sm:$0xf]
  %v69 = vld [vmem:[%s2 + $0xbc] sm:$0xf]
  %v70 = vld [vmem:[%s1] sm:$0xff]
  %v71 = vld [vmem:[%s1 + $0x8] sm:$0xf]
  %v72 = vld [vmem:[%s1 + $0xc] sm:$0xff]
  %v73 = vld [vmem:[%s1 + $0x14] sm:$0xf]
  %v78 = vunpack.c.l.b16 %v70
  %v79 = vunpack.c.h.b16 %v70
  %v80 = vunpack.c.l.b16 %v71
  %v81 = vunpack.c.l.b16 %v72
  %v82 = vunpack.c.h.b16 %v72
  %v83 = vunpack.c.l.b16 %v73
  %v84 = vpack.c.b16 %v81, %v78
  %v85 = vpack.c.b16 %v82, %v79
  %v86 = vpack.c.b16 %v83, %v80
  %v138 = vunpack.c.l.b16 %v22
  %v139 = vunpack.c.l.b16 %v23
  %v140 = vunpack.c.l.b16 %v24
  %v141 = vunpack.c.l.b16 %v25
  %v142 = vunpack.c.l.b16 %v26
  %v143 = vunpack.c.l.b16 %v27
  %v144 = vunpack.c.l.b16 %v28
  %v145 = vunpack.c.l.b16 %v29
  %v146 = vunpack.c.l.b16 %v30
  %v147 = vunpack.c.l.b16 %v31
  %v148 = vunpack.c.l.b16 %v32
  %v149 = vunpack.c.l.b16 %v33
  %v150 = vunpack.c.l.b16 %v34
  %v151 = vunpack.c.l.b16 %v35
  %v152 = vunpack.c.l.b16 %v36
  %v153 = vunpack.c.l.b16 %v37
  %v154 = vunpack.c.l.b16 %v38
  %v155 = vunpack.c.l.b16 %v39
  %v156 = vunpack.c.l.b16 %v40
  %v157 = vunpack.c.l.b16 %v41
  %v158 = vunpack.c.l.b16 %v42
  %v159 = vunpack.c.l.b16 %v43
  %v160 = vunpack.c.l.b16 %v44
  %v161 = vunpack.c.l.b16 %v45
  %v162 = vunpack.c.l.b16 %v46
  %v163 = vunpack.c.l.b16 %v47
  %v164 = vunpack.c.l.b16 %v48
  %v165 = vunpack.c.l.b16 %v49
  %v166 = vunpack.c.l.b16 %v50
  %v167 = vunpack.c.l.b16 %v51
  %v168 = vunpack.c.l.b16 %v52
  %v169 = vunpack.c.l.b16 %v53
  %v170 = vunpack.c.l.b16 %v54
  %v171 = vunpack.c.l.b16 %v55
  %v172 = vunpack.c.l.b16 %v56
  %v173 = vunpack.c.l.b16 %v57
  %v174 = vunpack.c.l.b16 %v58
  %v175 = vunpack.c.l.b16 %v59
  %v176 = vunpack.c.l.b16 %v60
  %v177 = vunpack.c.l.b16 %v61
  %v178 = vunpack.c.l.b16 %v62
  %v179 = vunpack.c.l.b16 %v63
  %v180 = vunpack.c.l.b16 %v64
  %v181 = vunpack.c.l.b16 %v65
  %v182 = vunpack.c.l.b16 %v66
  %v183 = vunpack.c.l.b16 %v67
  %v184 = vunpack.c.l.b16 %v68
  %v185 = vunpack.c.l.b16 %v69
  %v186 = vpack.c.b16 %v139, %v138
  %v187 = vpack.c.b16 %v141, %v140
  %v188 = vpack.c.b16 %v143, %v142
  %v189 = vpack.c.b16 %v145, %v144
  %v190 = vpack.c.b16 %v147, %v146
  %v191 = vpack.c.b16 %v149, %v148
  %v192 = vpack.c.b16 %v151, %v150
  %v193 = vpack.c.b16 %v153, %v152
  %v194 = vpack.c.b16 %v155, %v154
  %v195 = vpack.c.b16 %v157, %v156
  %v196 = vpack.c.b16 %v159, %v158
  %v197 = vpack.c.b16 %v161, %v160
  %v198 = vpack.c.b16 %v163, %v162
  %v199 = vpack.c.b16 %v165, %v164
  %v200 = vpack.c.b16 %v167, %v166
  %v201 = vpack.c.b16 %v169, %v168
  %v202 = vpack.c.b16 %v171, %v170
  %v203 = vpack.c.b16 %v173, %v172
  %v204 = vpack.c.b16 %v175, %v174
  %v205 = vpack.c.b16 %v177, %v176
  %v206 = vpack.c.b16 %v179, %v178
  %v207 = vpack.c.b16 %v181, %v180
  %v208 = vpack.c.b16 %v183, %v182
  %v209 = vpack.c.b16 %v185, %v184
  %234 = vmatprep.subr.bf16.mxu0 0
  %235 = vmatpush1.bf16.msra.mxu0 %v193
  %236 = vmatprep.subr.bf16.mxu0 0
  %237 = vmatpush1.bf16.msra.mxu0 %v192
  %238 = vmatprep.subr.bf16.mxu0 0
  %239 = vmatpush1.bf16.msra.mxu0 %v191
  %240 = vmatprep.subr.bf16.mxu0 0
  %241 = vmatpush1.bf16.msra.mxu0 %v190
  %242 = vmatprep.subr.bf16.mxu0 0
  %243 = vmatpush1.bf16.msra.mxu0 %v189
  %244 = vmatprep.subr.bf16.mxu0 0
  %245 = vmatpush1.bf16.msra.mxu0 %v188
  %246 = vmatprep.subr.bf16.mxu0 0
  %247 = vmatpush1.bf16.msra.mxu0 %v187
  %248 = vmatprep.subr.bf16.mxu0 0
  %249 = vmatpush1.bf16.msra.mxu0 %v186
  %250 = vmatprep.subr.bf16.mxu0 0
  %251 = vmatpush2.bf16.msra.mxu0 %v201
  %252 = vmatprep.subr.bf16.mxu0 0
  %253 = vmatpush2.bf16.msra.mxu0 %v200
  %254 = vmatprep.subr.bf16.mxu0 0
  %255 = vmatpush2.bf16.msra.mxu0 %v199
  %256 = vmatprep.subr.bf16.mxu0 0
  %257 = vmatpush2.bf16.msra.mxu0 %v198
  %258 = vmatprep.subr.bf16.mxu0 0
  %259 = vmatpush2.bf16.msra.mxu0 %v197
  %260 = vmatprep.subr.bf16.mxu0 0
  %261 = vmatpush2.bf16.msra.mxu0 %v196
  %262 = vmatprep.subr.bf16.mxu0 0
  %263 = vmatpush2.bf16.msra.mxu0 %v195
  %264 = vmatprep.subr.bf16.mxu0 0
  %265 = vmatpush2.bf16.msra.mxu0 %v194
  %266 = vmatprep.mubr.bf16.mxu0 %v85
  %267 = vmatmul.mubr.bf16.gmra.mxu0 %v84
  %v268 = vpop.f32.mrf.mxu0
  %v269 = vadd.f32 0.0, %v268
  %v270 = vpop.f32.mrf.mxu0
  %v271 = vpop.f32.mrf.mxu0
  %v272 = vadd.f32 0.0, %v271
  %v273 = vpop.f32.mrf.mxu0
  %274 = vdwg.mxu0
  %275 = vmatprep.subr.bf16.mxu0 0
  %276 = vmatpush1.bf16.msra.mxu0 %v209
  %277 = vmatprep.subr.bf16.mxu0 0
  %278 = vmatpush1.bf16.msra.mxu0 %v208
  %279 = vmatprep.subr.bf16.mxu0 0
  %280 = vmatpush1.bf16.msra.mxu0 %v207
  %281 = vmatprep.subr.bf16.mxu0 0
  %282 = vmatpush1.bf16.msra.mxu0 %v206
  %283 = vmatprep.subr.bf16.mxu0 0
  %284 = vmatpush1.bf16.msra.mxu0 %v205
  %285 = vmatprep.subr.bf16.mxu0 0
  %286 = vmatpush1.bf16.msra.mxu0 %v204
  %287 = vmatprep.subr.bf16.mxu0 0
  %288 = vmatpush1.bf16.msra.mxu0 %v203
  %289 = vmatprep.subr.bf16.mxu0 0
  %290 = vmatpush1.bf16.msra.mxu0 %v202
  %291 = vmatprep.subr.bf16.mxu0 0
  %292 = vmatpush2.bf16.msra.mxu0 0
  %293 = vmatprep.subr.bf16.mxu0 0
  %294 = vmatpush2.bf16.msra.mxu0 0
  %295 = vmatprep.subr.bf16.mxu0 0
  %296 = vmatpush2.bf16.msra.mxu0 0
  %297 = vmatprep.subr.bf16.mxu0 0
  %298 = vmatpush2.bf16.msra.mxu0 0
  %299 = vmatprep.subr.bf16.mxu0 0
  %300 = vmatpush2.bf16.msra.mxu0 0
  %301 = vmatprep.subr.bf16.mxu0 0
  %302 = vmatpush2.bf16.msra.mxu0 0
  %303 = vmatprep.subr.bf16.mxu0 0
  %304 = vmatpush2.bf16.msra.mxu0 0
  %305 = vmatprep.subr.bf16.mxu0 0
  %306 = vmatpush2.bf16.msra.mxu0 0
  %307 = vmatprep.mubr.bf16.mxu0 0
  %308 = vmatmul.mubr.bf16.gmra.mxu0 %v86
  %v309 = vpop.f32.mrf.mxu0
  %v310 = vadd.f32 %v269, %v309
  %v311 = vpop.f32.mrf.mxu0
  %v312 = vpop.f32.mrf.mxu0
  %v313 = vadd.f32 %v272, %v312
  %v314 = vpop.f32.mrf.mxu0
  %315 = vdwg.mxu0
  %v320 = vunpack.c.l.b16 %v18
  %v321 = vunpack.c.h.b16 %v18
  %v322 = vunpack.c.l.b16 %v19
  %v323 = vunpack.c.l.b16 %v20
  %v324 = vunpack.c.h.b16 %v20
  %v325 = vunpack.c.l.b16 %v21
  %v326 = vpack.c.b16 %v323, %v320
  %v327 = vpack.c.b16 %v324, %v321
  %v328 = vpack.c.b16 %v325, %v322
  %332 = vmatprep.subr.bf16.mxu0 0
  %333 = vmatpush1.bf16.msra.mxu0 %v193
  %334 = vmatprep.subr.bf16.mxu0 0
  %335 = vmatpush1.bf16.msra.mxu0 %v192
  %336 = vmatprep.subr.bf16.mxu0 0
  %337 = vmatpush1.bf16.msra.mxu0 %v191
  %338 = vmatprep.subr.bf16.mxu0 0
  %339 = vmatpush1.bf16.msra.mxu0 %v190
  %340 = vmatprep.subr.bf16.mxu0 0
  %341 = vmatpush1.bf16.msra.mxu0 %v189
  %342 = vmatprep.subr.bf16.mxu0 0
  %343 = vmatpush1.bf16.msra.mxu0 %v188
  %344 = vmatprep.subr.bf16.mxu0 0
  %345 = vmatpush1.bf16.msra.mxu0 %v187
  %346 = vmatprep.subr.bf16.mxu0 0
  %347 = vmatpush1.bf16.msra.mxu0 %v186
  %348 = vmatprep.subr.bf16.mxu0 0
  %349 = vmatpush2.bf16.msra.mxu0 %v201
  %350 = vmatprep.subr.bf16.mxu0 0
  %351 = vmatpush2.bf16.msra.mxu0 %v200
  %352 = vmatprep.subr.bf16.mxu0 0
  %353 = vmatpush2.bf16.msra.mxu0 %v199
  %354 = vmatprep.subr.bf16.mxu0 0
  %355 = vmatpush2.bf16.msra.mxu0 %v198
  %356 = vmatprep.subr.bf16.mxu0 0
  %357 = vmatpush2.bf16.msra.mxu0 %v197
  %358 = vmatprep.subr.bf16.mxu0 0
  %359 = vmatpush2.bf16.msra.mxu0 %v196
  %360 = vmatprep.subr.bf16.mxu0 0
  %361 = vmatpush2.bf16.msra.mxu0 %v195
  %362 = vmatprep.subr.bf16.mxu0 0
  %363 = vmatpush2.bf16.msra.mxu0 %v194
  %364 = vmatprep.mubr.bf16.mxu0 %v327
  %365 = vmatmul.mubr.bf16.gmra.mxu0 %v326
  %v366 = vpop.f32.mrf.mxu0
  %v367 = vadd.f32 %v310, %v366
  %v368 = vpop.f32.mrf.mxu0
  %v369 = vpop.f32.mrf.mxu0
  %v370 = vadd.f32 %v313, %v369
  %v371 = vpop.f32.mrf.mxu0
  %372 = vdwg.mxu0
  %373 = vmatprep.subr.bf16.mxu0 0
  %374 = vmatpush1.bf16.msra.mxu0 %v209
  %375 = vmatprep.subr.bf16.mxu0 0
  %376 = vmatpush1.bf16.msra.mxu0 %v208
  %377 = vmatprep.subr.bf16.mxu0 0
  %378 = vmatpush1.bf16.msra.mxu0 %v207
  %379 = vmatprep.subr.bf16.mxu0 0
  %380 = vmatpush1.bf16.msra.mxu0 %v206
  %381 = vmatprep.subr.bf16.mxu0 0
  %382 = vmatpush1.bf16.msra.mxu0 %v205
  %383 = vmatprep.subr.bf16.mxu0 0
  %384 = vmatpush1.bf16.msra.mxu0 %v204
  %385 = vmatprep.subr.bf16.mxu0 0
  %386 = vmatpush1.bf16.msra.mxu0 %v203
  %387 = vmatprep.subr.bf16.mxu0 0
  %388 = vmatpush1.bf16.msra.mxu0 %v202
  %389 = vmatprep.subr.bf16.mxu0 0
  %390 = vmatpush2.bf16.msra.mxu0 0
  %391 = vmatprep.subr.bf16.mxu0 0
  %392 = vmatpush2.bf16.msra.mxu0 0
  %393 = vmatprep.subr.bf16.mxu0 0
  %394 = vmatpush2.bf16.msra.mxu0 0
  %395 = vmatprep.subr.bf16.mxu0 0
  %396 = vmatpush2.bf16.msra.mxu0 0
  %397 = vmatprep.subr.bf16.mxu0 0
  %398 = vmatpush2.bf16.msra.mxu0 0
  %399 = vmatprep.subr.bf16.mxu0 0
  %400 = vmatpush2.bf16.msra.mxu0 0
  %401 = vmatprep.subr.bf16.mxu0 0
  %402 = vmatpush2.bf16.msra.mxu0 0
  %403 = vmatprep.subr.bf16.mxu0 0
  %404 = vmatpush2.bf16.msra.mxu0 0
  %405 = vmatprep.mubr.bf16.mxu0 0
  %406 = vmatmul.mubr.bf16.gmra.mxu0 %v328
  %v407 = vpop.f32.mrf.mxu0
  %v408 = vadd.f32 %v367, %v407
  %v409 = vpop.f32.mrf.mxu0
  %v410 = vpop.f32.mrf.mxu0
  %v411 = vadd.f32 %v370, %v410
  %v412 = vpop.f32.mrf.mxu0
  %413 = vdwg.mxu0
  %v414 = vld [vmem:[%s3] sm:$0xf]
  %v415 = vld [vmem:[%s3 + $0x4] sm:$0xf]
  %v416 = vld [vmem:[%s3 + $0x8] sm:$0xf]
  %v417 = vld [vmem:[%s3 + $0xc] sm:$0xf]
  %v418 = vld [vmem:[%s3 + $0x10] sm:$0xf]
  %v419 = vld [vmem:[%s3 + $0x14] sm:$0xf]
  %v420 = vld [vmem:[%s3 + $0x18] sm:$0xf]
  %v421 = vld [vmem:[%s3 + $0x1c] sm:$0xf]
  %v422 = vld [vmem:[%s3 + $0x20] sm:$0xf]
  %v423 = vld [vmem:[%s3 + $0x24] sm:$0xf]
  %v424 = vld [vmem:[%s3 + $0x28] sm:$0xf]
  %v425 = vld [vmem:[%s3 + $0x2c] sm:$0xf]
  %v426 = vld [vmem:[%s3 + $0x30] sm:$0xf]
  %v427 = vld [vmem:[%s3 + $0x34] sm:$0xf]
  %v428 = vld [vmem:[%s3 + $0x38] sm:$0xf]
  %v429 = vld [vmem:[%s3 + $0x3c] sm:$0xf]
  %v430 = vld [vmem:[%s3 + $0x40] sm:$0xf]
  %v431 = vld [vmem:[%s3 + $0x44] sm:$0xf]
  %v432 = vld [vmem:[%s3 + $0x48] sm:$0xf]
  %v433 = vld [vmem:[%s3 + $0x4c] sm:$0xf]
  %v434 = vld [vmem:[%s3 + $0x50] sm:$0xf]
  %v435 = vld [vmem:[%s3 + $0x54] sm:$0xf]
  %v436 = vld [vmem:[%s3 + $0x58] sm:$0xf]
  %v437 = vld [vmem:[%s3 + $0x5c] sm:$0xf]
  %v438 = vld [vmem:[%s3 + $0x60] sm:$0xf]
  %v439 = vld [vmem:[%s3 + $0x64] sm:$0xf]
  %v440 = vld [vmem:[%s3 + $0x68] sm:$0xf]
  %v441 = vld [vmem:[%s3 + $0x6c] sm:$0xf]
  %v442 = vld [vmem:[%s3 + $0x70] sm:$0xf]
  %v443 = vld [vmem:[%s3 + $0x74] sm:$0xf]
  %v444 = vld [vmem:[%s3 + $0x78] sm:$0xf]
  %v445 = vld [vmem:[%s3 + $0x7c] sm:$0xf]
  %v446 = vld [vmem:[%s3 + $0x80] sm:$0xf]
  %v447 = vld [vmem:[%s3 + $0x84] sm:$0xf]
  %v448 = vld [vmem:[%s3 + $0x88] sm:$0xf]
  %v449 = vld [vmem:[%s3 + $0x8c] sm:$0xf]
  %v450 = vld [vmem:[%s3 + $0x90] sm:$0xf]
  %v451 = vld [vmem:[%s3 + $0x94] sm:$0xf]
  %v452 = vld [vmem:[%s3 + $0x98] sm:$0xf]
  %v453 = vld [vmem:[%s3 + $0x9c] sm:$0xf]
  %v454 = vld [vmem:[%s3 + $0xa0] sm:$0xf]
  %v455 = vld [vmem:[%s3 + $0xa4] sm:$0xf]
  %v456 = vld [vmem:[%s3 + $0xa8] sm:$0xf]
  %v457 = vld [vmem:[%s3 + $0xac] sm:$0xf]
  %v458 = vld [vmem:[%s3 + $0xb0] sm:$0xf]
  %v459 = vld [vmem:[%s3 + $0xb4] sm:$0xf]
  %v460 = vld [vmem:[%s3 + $0xb8] sm:$0xf]
  %v461 = vld [vmem:[%s3 + $0xbc] sm:$0xf]
  %v510 = vunpack.c.l.b16 %v414
  %v511 = vunpack.c.l.b16 %v415
  %v512 = vunpack.c.l.b16 %v416
  %v513 = vunpack.c.l.b16 %v417
  %v514 = vunpack.c.l.b16 %v418
  %v515 = vunpack.c.l.b16 %v419
  %v516 = vunpack.c.l.b16 %v420
  %v517 = vunpack.c.l.b16 %v421
  %v518 = vunpack.c.l.b16 %v422
  %v519 = vunpack.c.l.b16 %v423
  %v520 = vunpack.c.l.b16 %v424
  %v521 = vunpack.c.l.b16 %v425
  %v522 = vunpack.c.l.b16 %v426
  %v523 = vunpack.c.l.b16 %v427
  %v524 = vunpack.c.l.b16 %v428
  %v525 = vunpack.c.l.b16 %v429
  %v526 = vunpack.c.l.b16 %v430
  %v527 = vunpack.c.l.b16 %v431
  %v528 = vunpack.c.l.b16 %v432
  %v529 = vunpack.c.l.b16 %v433
  %v530 = vunpack.c.l.b16 %v434
  %v531 = vunpack.c.l.b16 %v435
  %v532 = vunpack.c.l.b16 %v436
  %v533 = vunpack.c.l.b16 %v437
  %v534 = vunpack.c.l.b16 %v438
  %v535 = vunpack.c.l.b16 %v439
  %v536 = vunpack.c.l.b16 %v440
  %v537 = vunpack.c.l.b16 %v441
  %v538 = vunpack.c.l.b16 %v442
  %v539 = vunpack.c.l.b16 %v443
  %v540 = vunpack.c.l.b16 %v444
  %v541 = vunpack.c.l.b16 %v445
  %v542 = vunpack.c.l.b16 %v446
  %v543 = vunpack.c.l.b16 %v447
  %v544 = vunpack.c.l.b16 %v448
  %v545 = vunpack.c.l.b16 %v449
  %v546 = vunpack.c.l.b16 %v450
  %v547 = vunpack.c.l.b16 %v451
  %v548 = vunpack.c.l.b16 %v452
  %v549 = vunpack.c.l.b16 %v453
  %v550 = vunpack.c.l.b16 %v454
  %v551 = vunpack.c.l.b16 %v455
  %v552 = vunpack.c.l.b16 %v456
  %v553 = vunpack.c.l.b16 %v457
  %v554 = vunpack.c.l.b16 %v458
  %v555 = vunpack.c.l.b16 %v459
  %v556 = vunpack.c.l.b16 %v460
  %v557 = vunpack.c.l.b16 %v461
  %v558 = vpack.c.b16 %v511, %v510
  %v559 = vpack.c.b16 %v513, %v512
  %v560 = vpack.c.b16 %v515, %v514
  %v561 = vpack.c.b16 %v517, %v516
  %v562 = vpack.c.b16 %v519, %v518
  %v563 = vpack.c.b16 %v521, %v520
  %v564 = vpack.c.b16 %v523, %v522
  %v565 = vpack.c.b16 %v525, %v524
  %v566 = vpack.c.b16 %v527, %v526
  %v567 = vpack.c.b16 %v529, %v528
  %v568 = vpack.c.b16 %v531, %v530
  %v569 = vpack.c.b16 %v533, %v532
  %v570 = vpack.c.b16 %v535, %v534
  %v571 = vpack.c.b16 %v537, %v536
  %v572 = vpack.c.b16 %v539, %v538
  %v573 = vpack.c.b16 %v541, %v540
  %v574 = vpack.c.b16 %v543, %v542
  %v575 = vpack.c.b16 %v545, %v544
  %v576 = vpack.c.b16 %v547, %v546
  %v577 = vpack.c.b16 %v549, %v548
  %v578 = vpack.c.b16 %v551, %v550
  %v579 = vpack.c.b16 %v553, %v552
  %v580 = vpack.c.b16 %v555, %v554
  %v581 = vpack.c.b16 %v557, %v556
  %606 = vmatprep.subr.bf16.mxu0 0
  %607 = vmatpush1.bf16.msra.mxu0 %v565
  %608 = vmatprep.subr.bf16.mxu0 0
  %609 = vmatpush1.bf16.msra.mxu0 %v564
  %610 = vmatprep.subr.bf16.mxu0 0
  %611 = vmatpush1.bf16.msra.mxu0 %v563
  %612 = vmatprep.subr.bf16.mxu0 0
  %613 = vmatpush1.bf16.msra.mxu0 %v562
  %614 = vmatprep.subr.bf16.mxu0 0
  %615 = vmatpush1.bf16.msra.mxu0 %v561
  %616 = vmatprep.subr.bf16.mxu0 0
  %617 = vmatpush1.bf16.msra.mxu0 %v560
  %618 = vmatprep.subr.bf16.mxu0 0
  %619 = vmatpush1.bf16.msra.mxu0 %v559
  %620 = vmatprep.subr.bf16.mxu0 0
  %621 = vmatpush1.bf16.msra.mxu0 %v558
  %622 = vmatprep.subr.bf16.mxu0 0
  %623 = vmatpush2.bf16.msra.mxu0 %v573
  %624 = vmatprep.subr.bf16.mxu0 0
  %625 = vmatpush2.bf16.msra.mxu0 %v572
  %626 = vmatprep.subr.bf16.mxu0 0
  %627 = vmatpush2.bf16.msra.mxu0 %v571
  %628 = vmatprep.subr.bf16.mxu0 0
  %629 = vmatpush2.bf16.msra.mxu0 %v570
  %630 = vmatprep.subr.bf16.mxu0 0
  %631 = vmatpush2.bf16.msra.mxu0 %v569
  %632 = vmatprep.subr.bf16.mxu0 0
  %633 = vmatpush2.bf16.msra.mxu0 %v568
  %634 = vmatprep.subr.bf16.mxu0 0
  %635 = vmatpush2.bf16.msra.mxu0 %v567
  %636 = vmatprep.subr.bf16.mxu0 0
  %637 = vmatpush2.bf16.msra.mxu0 %v566
  %638 = vmatprep.mubr.bf16.mxu0 %v327
  %639 = vmatmul.mubr.bf16.gmra.mxu0 %v326
  %v640 = vpop.f32.mrf.mxu0
  %v641 = vadd.f32 0.0, %v640
  %v642 = vpop.f32.mrf.mxu0
  %v643 = vpop.f32.mrf.mxu0
  %v644 = vadd.f32 0.0, %v643
  %v645 = vpop.f32.mrf.mxu0
  %646 = vdwg.mxu0
  %647 = vmatprep.subr.bf16.mxu0 0
  %648 = vmatpush1.bf16.msra.mxu0 %v581
  %649 = vmatprep.subr.bf16.mxu0 0
  %650 = vmatpush1.bf16.msra.mxu0 %v580
  %651 = vmatprep.subr.bf16.mxu0 0
  %652 = vmatpush1.bf16.msra.mxu0 %v579
  %653 = vmatprep.subr.bf16.mxu0 0
  %654 = vmatpush1.bf16.msra.mxu0 %v578
  %655 = vmatprep.subr.bf16.mxu0 0
  %656 = vmatpush1.bf16.msra.mxu0 %v577
  %657 = vmatprep.subr.bf16.mxu0 0
  %658 = vmatpush1.bf16.msra.mxu0 %v576
  %659 = vmatprep.subr.bf16.mxu0 0
  %660 = vmatpush1.bf16.msra.mxu0 %v575
  %661 = vmatprep.subr.bf16.mxu0 0
  %662 = vmatpush1.bf16.msra.mxu0 %v574
  %663 = vmatprep.subr.bf16.mxu0 0
  %664 = vmatpush2.bf16.msra.mxu0 0
  %665 = vmatprep.subr.bf16.mxu0 0
  %666 = vmatpush2.bf16.msra.mxu0 0
  %667 = vmatprep.subr.bf16.mxu0 0
  %668 = vmatpush2.bf16.msra.mxu0 0
  %669 = vmatprep.subr.bf16.mxu0 0
  %670 = vmatpush2.bf16.msra.mxu0 0
  %671 = vmatprep.subr.bf16.mxu0 0
  %672 = vmatpush2.bf16.msra.mxu0 0
  %673 = vmatprep.subr.bf16.mxu0 0
  %674 = vmatpush2.bf16.msra.mxu0 0
  %675 = vmatprep.subr.bf16.mxu0 0
  %676 = vmatpush2.bf16.msra.mxu0 0
  %677 = vmatprep.subr.bf16.mxu0 0
  %678 = vmatpush2.bf16.msra.mxu0 0
  %679 = vmatprep.mubr.bf16.mxu0 0
  %680 = vmatmul.mubr.bf16.gmra.mxu0 %v328
  %v681 = vpop.f32.mrf.mxu0
  %v682 = vadd.f32 %v641, %v681
  %v683 = vpop.f32.mrf.mxu0
  %v684 = vpop.f32.mrf.mxu0
  %v685 = vadd.f32 %v644, %v684
  %v686 = vpop.f32.mrf.mxu0
  %687 = vdwg.mxu0
  %v688 = vadd.f32 %v408, %v682
  %v689 = vadd.f32 %v411, %v685
  %690 = vst [vmem:[%s4] sm:$0xff] %v688
  %691 = vst [vmem:[%s4 + $0x8] sm:$0xff] %v689
  // Predicated region
  $region18: #{decimate.1} parent=0 // pred_check
    _
  $region19: #{decimate.1} parent=0 // pred_check_branch
    %693 = sbr.rel (0) target = $region21
  $region20: #{decimate.1} parent=0 // pred_region
    _
  $region21: #{decimate.1} parent=0 // pred_fallthru
    _
  // Predicated region
  $region22: #{decimate.1} parent=0 // pred_check
    _
  $region23: #{decimate.1} parent=0 // pred_check_branch
    %695 = sbr.rel (0) target = $region25
  $region24: #{decimate.1} parent=0 // pred_region
    _
  $region25: #{decimate.1} parent=0 // pred_fallthru
    _

</llo_original>
